<compile_context>
chip_gen: v7x
topology: tpu7x:2x2x1
jax: 0.10.0
libtpu: 0.0.40
codegen_flags: <defaults>
</compile_context>

<pallas_src>
from typing import NamedTuple

import jax
import jax.numpy as jnp
from jax.experimental import pallas as pl
from jax.experimental.pallas import tpu as pltpu


_LANE = 128
_SUBLANE = 8
_MiB = 1024 * 1024
_MIN_ROWS_FOR_SPLIT = 256          # beyond this, force >= 2 grid steps (v7x megacore)
_MOSAIC_SCRATCH_BYTES = 8 * _MiB   # headroom left for Mosaic internal scratch


def _round_up(x: int, m: int) -> int:
    return ((x + m - 1) // m) * m


def _vmem_budget():
    """Per-generation VMEM limit: ~96 MiB on v5e/v6e (128 MiB parts),
    48 MiB on v7x (64 MiB per TensorCore) or when detection fails."""
    try:
        cap = int(pltpu.get_tpu_info().vmem_capacity_bytes)
    except Exception:
        cap = 64 * _MiB
    limit = 96 * _MiB if cap >= 128 * _MiB else 48 * _MiB
    return limit, limit - _MOSAIC_SCRATCH_BYTES


# ---------------------------------------------------------------------------
# Kernel
# ---------------------------------------------------------------------------
def _mlp_kernel(x_ref, w1_ref, b1_ref, w2_ref, b2_ref, w3_ref, b3_ref, o_ref):
    """Fused 3-layer MLP on one batch tile.

    x_ref        : (TB, D_core)        VMEM, input dtype (cast in-kernel)
    w1_ref       : (D_core, Hp)        whole array in VMEM, compute dtype
    w2_ref,w3_ref: (Hp, Hp)            whole array in VMEM, compute dtype
    b*_ref       : (1, Hp)             whole array in VMEM, float32
    o_ref        : (TB, Hp)            VMEM, output dtype
    """
    # Cast to the MXU compute dtype here (VPU op) rather than in the wrapper,
    # avoiding a separate HBM read+write pass over x.
    x = x_ref[...].astype(w1_ref.dtype)

    # Layer 1: MXU matmul (compute dtype in, f32 acc), bias + ReLU in f32.
    h = jnp.dot(x, w1_ref[...], preferred_element_type=jnp.float32)
    h = jnp.maximum(h + b1_ref[...], 0.0)

    # Layer 2.
    h = jnp.dot(h.astype(w2_ref.dtype), w2_ref[...],
                preferred_element_type=jnp.float32)
    h = jnp.maximum(h + b2_ref[...], 0.0)

    # Layer 3: no activation.
    h = jnp.dot(h.astype(w3_ref.dtype), w3_ref[...],
                preferred_element_type=jnp.float32)
    o_ref[...] = (h + b3_ref[...]).astype(o_ref.dtype)


# ---------------------------------------------------------------------------
# One-time parameter preparation (hoisted out of the hot path)
# ---------------------------------------------------------------------------
class PreparedParams(NamedTuple):
    w1: jax.Array
    b1: jax.Array
    w2: jax.Array
    b2: jax.Array
    w3: jax.Array
    b3: jax.Array
    hidden: int
    h_pad: int


def prepare_params(params, *, compute_dtype=jnp.bfloat16, lane_align=_LANE):
    """Pad the hidden/lane dim and cast weights to the MXU compute dtype ONCE.

    Call this once per parameter set and reuse the result across forward calls
    (the per-call pad/cast ops previously dominated wall-clock at small shapes).
    Use lane_align=256 on v6e/v7x when hidden >= 512 to fill the 256-wide MXU.
    Zero-padding is exact: zeros stay zero through ReLU / zero weight rows and
    the pad is sliced off in the wrapper.
    """
    w1, b1, w2, b2, w3, b3 = params
    hidden = w1.shape[1]
    h_pad = _round_up(hidden, lane_align)
    if h_pad != hidden:
        ph = h_pad - hidden
        w1 = jnp.pad(w1, ((0, 0), (0, ph)))
        b1 = jnp.pad(b1, ((0, 0), (0, ph)))
        w2 = jnp.pad(w2, ((0, ph), (0, ph)))
        b2 = jnp.pad(b2, ((0, 0), (0, ph)))
        w3 = jnp.pad(w3, ((0, ph), (0, ph)))
        b3 = jnp.pad(b3, ((0, 0), (0, ph)))
    return PreparedParams(
        w1.astype(compute_dtype), b1.astype(jnp.float32),
        w2.astype(compute_dtype), b2.astype(jnp.float32),
        w3.astype(compute_dtype), b3.astype(jnp.float32),
        hidden, h_pad)


# ---------------------------------------------------------------------------
# Wrapper
# ---------------------------------------------------------------------------
def property_prediction_forward(z_core, params, *,
                                batch_tile: int = 2048,
                                compute_dtype=jnp.bfloat16,
                                out_dtype=None):
    """Run the fused MLP kernel over the batch dimension.

    z_core : (B, core_dim) float array
    params : PreparedParams (preferred; prepared once), or a raw
             (w1, b1, w2, b2, w3, b3) tuple with w stored as (in_dim, out_dim)
             so the kernel computes x @ W + b (== PyTorch x @ W_t.T + b).
    """
    if not isinstance(params, PreparedParams):
        params = prepare_params(params, compute_dtype=compute_dtype)
    p = params

    B, d_core = z_core.shape
    hidden, h_pad = p.hidden, p.h_pad
    out_dtype = z_core.dtype if out_dtype is None else out_dtype

    # ---- per-generation VMEM budget & batch tile -------------------------
    vmem_limit, tile_budget = _vmem_budget()
    cbytes = jnp.dtype(p.w1.dtype).itemsize
    xbytes = jnp.dtype(z_core.dtype).itemsize
    obytes = jnp.dtype(out_dtype).itemsize

    weight_bytes = (d_core * h_pad + 2 * h_pad * h_pad) * cbytes + 3 * h_pad * 4
    # per row: double-buffered x in, double-buffered out, plus the three
    # materialized (tile, h_pad) f32 layer intermediates.
    per_row = 2 * d_core * xbytes + 2 * h_pad * obytes + 3 * h_pad * 4
    avail = max(tile_budget - weight_bytes, per_row * _SUBLANE)
    max_tile = max(_SUBLANE, (avail // per_row // _SUBLANE) * _SUBLANE)

    tile = max(_SUBLANE, (min(batch_tile, max_tile) // _SUBLANE) * _SUBLANE)
    if B >= _MIN_ROWS_FOR_SPLIT:
        # Keep >= 2 grid steps so ("parallel",) can shard across v7x's 2 TCs.
        tile = min(tile, _round_up(pl.cdiv(B, 2), _SUBLANE))
    else:
        tile = min(tile, _round_up(B, _SUBLANE))

    # No batch padding: Pallas masks the partial edge block's store, and the
    # MLP is row-independent so garbage rows read past B never contaminate
    # stored rows.
    grid = (pl.cdiv(B, tile),)

    # Grid-invariant weights/biases: whole array resident in VMEM, loaded once,
    # single-buffered (no per-step re-DMA, no double-buffer allocation).
    vmem_param = pl.BlockSpec(memory_space=pltpu.MemorySpace.VMEM)

    out = pl.pallas_call(
        _mlp_kernel,
        out_shape=jax.ShapeDtypeStruct((B, h_pad), out_dtype),
        grid_spec=pltpu.PrefetchScalarGridSpec(
            num_scalar_prefetch=0,
            grid=grid,
            in_specs=[
                pl.BlockSpec((tile, d_core), lambda i: (i, 0)),  # Z_core tile
                vmem_param, vmem_param,                          # w1, b1
                vmem_param, vmem_param,                          # w2, b2
                vmem_param, vmem_param,                          # w3, b3
            ],
            out_specs=pl.BlockSpec((tile, h_pad), lambda i: (i, 0)),
        ),
        compiler_params=pltpu.CompilerParams(
            dimension_semantics=("parallel",),   # megacore-shardable on v7x
            vmem_limit_bytes=vmem_limit,
        ),
    )(z_core, p.w1, p.b1, p.w2, p.b2, p.w3, p.b3)

    # Only slice when the hidden dim was actually lane-padded.
    return out if h_pad == hidden else out[:, :hidden]


# ---------------------------------------------------------------------------
# Parameter init + plain-JAX reference
# ---------------------------------------------------------------------------
def init_params(key, core_graph_vector_dim, hidden_dim, dtype=jnp.float32):
    """Deterministic synthetic parameters (shapes match the PyTorch module)."""
    ks = jax.random.split(key, 6)
    scale1 = 1.0 / jnp.sqrt(core_graph_vector_dim)
    scale2 = 1.0 / jnp.sqrt(hidden_dim)
    w1 = jax.random.normal(ks[0], (core_graph_vector_dim, hidden_dim), dtype) * scale1
    b1 = jax.random.normal(ks[1], (1, hidden_dim), dtype) * 0.01
    w2 = jax.random.normal(ks[2], (hidden_dim, hidden_dim), dtype) * scale2
    b2 = jax.random.normal(ks[3], (1, hidden_dim), dtype) * 0.01
    w3 = jax.random.normal(ks[4], (hidden_dim, hidden_dim), dtype) * scale2
    b3 = jax.random.normal(ks[5], (1, hidden_dim), dtype) * 0.01
    return (w1, b1, w2, b2, w3, b3)


def reference_forward(z_core, params, compute_dtype=jnp.float32):
    """Plain-JAX reference of the PyTorch forward (dropout=0), matching the
    kernel's precision policy: compute_dtype matmul inputs, f32 accumulate."""
    w1, b1, w2, b2, w3, b3 = params

    def lin(h, w, b, relu):
        y = jnp.dot(h.astype(compute_dtype), w.astype(compute_dtype),
                    preferred_element_type=jnp.float32) + b.astype(jnp.float32)
        return jnp.maximum(y, 0.0) if relu else y

    h = lin(z_core, w1, b1, True)
    h = lin(h, w2, b2, True)
    h = lin(h, w3, b3, False)
    return h.astype(z_core.dtype)


# ---------------------------------------------------------------------------
# Self-test
# ---------------------------------------------------------------------------
if __name__ == "__main__":
    key = jax.random.PRNGKey(0)
    k_x1, k_p1, k_x2, k_p2, k_x3 = jax.random.split(key, 5)

    # Config 1: module default hidden_dim=128, small batch.
    B1, D1, H1 = 64, 16, 128
    z1 = jax.random.normal(k_x1, (B1, D1), jnp.float32)
    params1 = init_params(k_p1, D1, H1)

    # Prepared-params (hot-path) usage, f32 compute.
    prep1_f32 = prepare_params(params1, compute_dtype=jnp.float32)
    out_f32 = jax.block_until_ready(
        property_prediction_forward(z1, prep1_f32, compute_dtype=jnp.float32))
    ref_f32 = reference_forward(z1, params1, jnp.float32)
    assert out_f32.shape == (B1, H1)
    assert jnp.allclose(out_f32, ref_f32, atol=1e-3, rtol=1e-3), "f32 mismatch"

    # Raw-params convenience path, bf16 MXU compute.
    out_bf16 = jax.block_until_ready(
        property_prediction_forward(z1, params1, compute_dtype=jnp.bfloat16))
    ref_bf16 = reference_forward(z1, params1, jnp.bfloat16)
    assert jnp.allclose(out_bf16, ref_bf16, atol=3e-2, rtol=3e-2), "bf16 mismatch"

    # Config 2: non-multiple-of-8 batch + non-128 hidden (partial edge block
    # with masked store + lane-padded hidden sliced off).
    B2, D2, H2 = 13, 16, 32
    z2 = jax.random.normal(k_x2, (B2, D2), jnp.float32)
    params2 = init_params(k_p2, D2, H2)
    out2 = jax.block_until_ready(
        property_prediction_forward(z2, params2, compute_dtype=jnp.float32))
    ref2 = reference_forward(z2, params2, jnp.float32)
    assert out2.shape == (B2, H2)
    assert jnp.allclose(out2, ref2, atol=1e-3, rtol=1e-3), "padded-hidden/edge mismatch"

    # Config 3: batch large enough to force a >=2-step grid with a partial
    # edge block (exercises megacore split path + masked store, multi-step).
    B3 = 600
    z3 = jax.random.normal(k_x3, (B3, D1), jnp.float32)
    out3 = jax.block_until_ready(
        property_prediction_forward(z3, prep1_f32, compute_dtype=jnp.float32))
    ref3 = reference_forward(z3, params1, jnp.float32)
    assert out3.shape == (B3, H1)
    assert jnp.allclose(out3, ref3, atol=1e-3, rtol=1e-3), "multi-step-grid mismatch"

    print("KERNEL_OK")
</pallas_src>

<mosaic_0001>
module attributes {stable_mosaic.version = 11 : i64} {
  func.func @_mlp_kernel(%arg0: i32, %arg1: memref<64x16xf32, #tpu.memory_space<vmem>>, %arg2: memref<16x128xf32, #tpu.memory_space<vmem>>, %arg3: memref<1x128xf32, #tpu.memory_space<vmem>>, %arg4: memref<128x128xf32, #tpu.memory_space<vmem>>, %arg5: memref<1x128xf32, #tpu.memory_space<vmem>>, %arg6: memref<128x128xf32, #tpu.memory_space<vmem>>, %arg7: memref<1x128xf32, #tpu.memory_space<vmem>>, %arg8: memref<64x128xf32, #tpu.memory_space<vmem>>) attributes {dimension_semantics = [#tpu.dimension_semantics<parallel>], iteration_bounds = array<i64: 1>, scalar_prefetch = 0 : i64, scratch_operands = 0 : i64, tpu.core_type = #tpu.core_type<tc>, window_params = [{transform_indices = @transform_0, window_bounds = array<i64: 64, 16>}, {pipeline_mode = #tpu.pipeline_mode<synchronous>, transform_indices = @transform_1, window_bounds = array<i64: 16, 128>}, {pipeline_mode = #tpu.pipeline_mode<synchronous>, transform_indices = @transform_2, window_bounds = array<i64: 1, 128>}, {pipeline_mode = #tpu.pipeline_mode<synchronous>, transform_indices = @transform_3, window_bounds = array<i64: 128, 128>}, {pipeline_mode = #tpu.pipeline_mode<synchronous>, transform_indices = @transform_4, window_bounds = array<i64: 1, 128>}, {pipeline_mode = #tpu.pipeline_mode<synchronous>, transform_indices = @transform_5, window_bounds = array<i64: 128, 128>}, {pipeline_mode = #tpu.pipeline_mode<synchronous>, transform_indices = @transform_6, window_bounds = array<i64: 1, 128>}, {transform_indices = @transform_7, window_bounds = array<i64: 64, 128>}]} {
    %c0 = arith.constant 0 : index
    %c0_0 = arith.constant 0 : index
    %0 = vector.load %arg1[%c0, %c0_0] : memref<64x16xf32, #tpu.memory_space<vmem>>, vector<64x16xf32>
    %c0_1 = arith.constant 0 : index
    %c0_2 = arith.constant 0 : index
    %1 = vector.load %arg2[%c0_1, %c0_2] : memref<16x128xf32, #tpu.memory_space<vmem>>, vector<16x128xf32>
    %cst = arith.constant dense<0.000000e+00> : vector<64x128xf32>
    %2 = tpu.matmul %0, %1, %cst {dimension_numbers = #tpu.dot_dimension_numbers<[1], [0], [0], [1], [0, 0, 1, 1], [], []>} : vector<64x16xf32>, vector<16x128xf32>, vector<64x128xf32> -> vector<64x128xf32>
    %c0_3 = arith.constant 0 : index
    %c0_4 = arith.constant 0 : index
    %3 = vector.load %arg3[%c0_3, %c0_4] : memref<1x128xf32, #tpu.memory_space<vmem>>, vector<1x128xf32>
    %4 = vector.broadcast %3 : vector<1x128xf32> to vector<64x128xf32>
    %5 = arith.addf %2, %4 : vector<64x128xf32>
    %cst_5 = arith.constant 0.000000e+00 : f32
    %6 = vector.broadcast %cst_5 : f32 to vector<64x128xf32>
    %7 = arith.maximumf %5, %6 : vector<64x128xf32>
    %c0_6 = arith.constant 0 : index
    %c0_7 = arith.constant 0 : index
    %8 = vector.load %arg4[%c0_6, %c0_7] : memref<128x128xf32, #tpu.memory_space<vmem>>, vector<128x128xf32>
    %cst_8 = arith.constant dense<0.000000e+00> : vector<64x128xf32>
    %9 = tpu.matmul %7, %8, %cst_8 {dimension_numbers = #tpu.dot_dimension_numbers<[1], [0], [0], [1], [0, 0, 1, 1], [], []>} : vector<64x128xf32>, vector<128x128xf32>, vector<64x128xf32> -> vector<64x128xf32>
    %c0_9 = arith.constant 0 : index
    %c0_10 = arith.constant 0 : index
    %10 = vector.load %arg5[%c0_9, %c0_10] : memref<1x128xf32, #tpu.memory_space<vmem>>, vector<1x128xf32>
    %11 = vector.broadcast %10 : vector<1x128xf32> to vector<64x128xf32>
    %12 = arith.addf %9, %11 : vector<64x128xf32>
    %cst_11 = arith.constant 0.000000e+00 : f32
    %13 = vector.broadcast %cst_11 : f32 to vector<64x128xf32>
    %14 = arith.maximumf %12, %13 : vector<64x128xf32>
    %c0_12 = arith.constant 0 : index
    %c0_13 = arith.constant 0 : index
    %15 = vector.load %arg6[%c0_12, %c0_13] : memref<128x128xf32, #tpu.memory_space<vmem>>, vector<128x128xf32>
    %cst_14 = arith.constant dense<0.000000e+00> : vector<64x128xf32>
    %16 = tpu.matmul %14, %15, %cst_14 {dimension_numbers = #tpu.dot_dimension_numbers<[1], [0], [0], [1], [0, 0, 1, 1], [], []>} : vector<64x128xf32>, vector<128x128xf32>, vector<64x128xf32> -> vector<64x128xf32>
    %c0_15 = arith.constant 0 : index
    %c0_16 = arith.constant 0 : index
    %17 = vector.load %arg7[%c0_15, %c0_16] : memref<1x128xf32, #tpu.memory_space<vmem>>, vector<1x128xf32>
    %18 = vector.broadcast %17 : vector<1x128xf32> to vector<64x128xf32>
    %19 = arith.addf %16, %18 : vector<64x128xf32>
    %c0_17 = arith.constant 0 : index
    %c0_18 = arith.constant 0 : index
    %20 = vector.load %arg8[%c0_17, %c0_18] : memref<64x128xf32, #tpu.memory_space<vmem>>, vector<64x128xf32>
    tpu.vector_store %arg8[%c0_17, %c0_18], %19 {strides = array<i32>} : memref<64x128xf32, #tpu.memory_space<vmem>>, vector<64x128xf32>,
    return
  }
  func.func @transform_0(%arg0: i32) -> (i32, i32) {
    %c0_i32 = arith.constant 0 : i32
    %c0_i32_0 = arith.constant 0 : i32
    return %arg0, %c0_i32 : i32, i32
  }
  func.func @transform_1(%arg0: i32) -> (i32, i32) {
    %c0_i32 = arith.constant 0 : i32
    %c0_i32_0 = arith.constant 0 : i32
    %c0_i32_1 = arith.constant 0 : i32
    return %c0_i32, %c0_i32_0 : i32, i32
  }
  func.func @transform_2(%arg0: i32) -> (i32, i32) {
    %c0_i32 = arith.constant 0 : i32
    %c0_i32_0 = arith.constant 0 : i32
    %c0_i32_1 = arith.constant 0 : i32
    return %c0_i32, %c0_i32_0 : i32, i32
  }
  func.func @transform_3(%arg0: i32) -> (i32, i32) {
    %c0_i32 = arith.constant 0 : i32
    %c0_i32_0 = arith.constant 0 : i32
    %c0_i32_1 = arith.constant 0 : i32
    return %c0_i32, %c0_i32_0 : i32, i32
  }
  func.func @transform_4(%arg0: i32) -> (i32, i32) {
    %c0_i32 = arith.constant 0 : i32
    %c0_i32_0 = arith.constant 0 : i32
    %c0_i32_1 = arith.constant 0 : i32
    return %c0_i32, %c0_i32_0 : i32, i32
  }
  func.func @transform_5(%arg0: i32) -> (i32, i32) {
    %c0_i32 = arith.constant 0 : i32
    %c0_i32_0 = arith.constant 0 : i32
    %c0_i32_1 = arith.constant 0 : i32
    return %c0_i32, %c0_i32_0 : i32, i32
  }
  func.func @transform_6(%arg0: i32) -> (i32, i32) {
    %c0_i32 = arith.constant 0 : i32
    %c0_i32_0 = arith.constant 0 : i32
    %c0_i32_1 = arith.constant 0 : i32
    return %c0_i32, %c0_i32_0 : i32, i32
  }
  func.func @transform_7(%arg0: i32) -> (i32, i32) {
    %c0_i32 = arith.constant 0 : i32
    %c0_i32_0 = arith.constant 0 : i32
    return %arg0, %c0_i32 : i32, i32
  }
}

</mosaic_0001>

<llo_original>
// kernel: tpu_custom_call.1
$region0: #{tpu_custom_call.1}
  #allocation0 [shape = 'u32[]', space=smem, size = 0x4, offset = 0x4, fixed_abs, tag = 'smem constant byte address 0x4 - core index']
  #allocation1 [shape = 'u32[144,128]{1,0:T(1,128)}', space=vmem, size = 0x12000, scoped, tag = 'internal scratch']
  %s0 = inlined_call_operand.vmem [shape: f32[64,16], index: 0, kind: input, shape index: {}]
  %s1 = inlined_call_operand.vmem [shape: f32[16,128], index: 1, kind: input, shape index: {}]
  %s2 = inlined_call_operand.vmem [shape: f32[1,128], index: 2, kind: input, shape index: {}]
  %s3 = inlined_call_operand.hbm [shape: f32[128,128], index: 3, kind: input, shape index: {}]
  %s4 = inlined_call_operand.vmem [shape: f32[1,128], index: 4, kind: input, shape index: {}]
  %s5 = inlined_call_operand.hbm [shape: f32[128,128], index: 5, kind: input, shape index: {}]
  %s6 = inlined_call_operand.vmem [shape: f32[1,128], index: 6, kind: input, shape index: {}]
  %s7 = inlined_call_operand.hbm [shape: f32[64,128], index: 7, kind: output, shape index: {}]
  %s8 = sld [smem:[#allocation0]]
  $region46: #{tpu_custom_call.1} parent=0
    _
  %s10 = ssub.s32 1, %s8
  %s11 = scalar_select 0, %s10, %s8
  $region1: #{tpu_custom_call.1} parent=0
    #allocation2 [shape = 'u8[65536]{0}', space=vmem, size = 0x10000, scoped, tag = 'input window, operand 3, single buffered']
    #allocation3 [shape = 's32[1]{0}', space=sflag, size = 0x4, scoped, tag = 'scoped memory for tpu_custom_call.1']
    #allocation4 [shape = 's32[1]{0}', space=sflag, size = 0x4, scoped, tag = 'scoped memory for tpu_custom_call.1']
    #allocation5 [shape = 'u8[65536]{0}', space=vmem, size = 0x10000, scoped, tag = 'input window, operand 5, single buffered']
    #allocation6 [shape = 's32[1]{0}', space=sflag, size = 0x4, scoped, tag = 'scoped memory for tpu_custom_call.1']
    #allocation7 [shape = 'u8[32768]{0}', space=vmem, size = 0x8000, scoped, tag = 'output window, operand 0, single buffered']
    %12 = vsyncpa [#allocation3], 0
    %13 = vsyncpa [#allocation6], 0
    %14 = vsyncpa [#allocation4], 0
    // Predicated region
    $region2: #{tpu_custom_call.1} parent=1 // pred_check
      _
    $region3: #{tpu_custom_call.1} parent=1 // pred_check_branch
      %16 = sbr.rel (0) target = $region5
    $region4: #{tpu_custom_call.1} parent=1 // pred_region
      _
    $region5: #{tpu_custom_call.1} parent=1 // pred_fallthru
      _
    // Predicated region
    $region6: #{tpu_custom_call.1} parent=1 // pred_check
      _
    $region7: #{tpu_custom_call.1} parent=1 // pred_check_branch
      %18 = sbr.rel (0) target = $region9
    $region8: #{tpu_custom_call.1} parent=1 // pred_region
      _
    $region9: #{tpu_custom_call.1} parent=1 // pred_fallthru
      _
    // Predicated region
    $region10: #{tpu_custom_call.1} parent=1 // pred_check
      _
    $region11: #{tpu_custom_call.1} parent=1 // pred_check_branch
      %20 = sbr.rel (0) target = $region13
    $region12: #{tpu_custom_call.1} parent=1 // pred_region
      _
    $region13: #{tpu_custom_call.1} parent=1 // pred_fallthru
      _
    // Predicated region
    $region14: #{tpu_custom_call.1} parent=1 // pred_check
      _
    $region15: #{tpu_custom_call.1} parent=1 // pred_check_branch
      %22 = sbr.rel (0) target = $region17
    $region16: #{tpu_custom_call.1} parent=1 // pred_region
      %s24 = ssub.s32 2048, 2048
      %25 = vsyncadd [#allocation3], %s24
      %s26 = sshll.u32 [#allocation2], 4
      %s27 = int_to_ptr.vmem [resolvable:$true] %s26
      %32 = dma.hbm_to_vmem [thread:$0]  %s3, 2048, %s27, [#allocation3], 128, 128, 8
    $region17: #{tpu_custom_call.1} parent=1 // pred_fallthru
      _
    // Predicated region
    $region18: #{tpu_custom_call.1} parent=1 // pred_check
      _
    $region19: #{tpu_custom_call.1} parent=1 // pred_check_branch
      %34 = sbr.rel (0) target = $region21
    $region20: #{tpu_custom_call.1} parent=1 // pred_region
      _
    $region21: #{tpu_custom_call.1} parent=1 // pred_fallthru
      _
    // Predicated region
    $region22: #{tpu_custom_call.1} parent=1 // pred_check
      _
    $region23: #{tpu_custom_call.1} parent=1 // pred_check_branch
      %36 = sbr.rel (0) target = $region25
    $region24: #{tpu_custom_call.1} parent=1 // pred_region
      %s38 = ssub.s32 2048, 2048
      %39 = vsyncadd [#allocation6], %s38
      %s40 = sshll.u32 [#allocation5], 4
      %s41 = int_to_ptr.vmem [resolvable:$true] %s40
      %46 = dma.hbm_to_vmem [thread:$0]  %s5, 2048, %s41, [#allocation6], 128, 128, 8
    $region25: #{tpu_custom_call.1} parent=1 // pred_fallthru
      _
    // Predicated region
    $region26: #{tpu_custom_call.1} parent=1 // pred_check
      _
    $region27: #{tpu_custom_call.1} parent=1 // pred_check_branch
      %48 = sbr.rel (0) target = $region29
    $region28: #{tpu_custom_call.1} parent=1 // pred_region
      _
    $region29: #{tpu_custom_call.1} parent=1 // pred_fallthru
      _
    // Predicated region
    $region30: #{tpu_custom_call.1} parent=1 // pred_check
      _
    $region31: #{tpu_custom_call.1} parent=1 // pred_check_branch
      %50 = sbr.rel (0) target = $region33
    $region32: #{tpu_custom_call.1} parent=1 // pred_region
      %51 = dma.done [#allocation3], 2048
    $region33: #{tpu_custom_call.1} parent=1 // pred_fallthru
      _
    // Predicated region
    $region34: #{tpu_custom_call.1} parent=1 // pred_check
      _
    $region35: #{tpu_custom_call.1} parent=1 // pred_check_branch
      %53 = sbr.rel (0) target = $region37
    $region36: #{tpu_custom_call.1} parent=1 // pred_region
      %54 = dma.done [#allocation6], 2048
    $region37: #{tpu_custom_call.1} parent=1 // pred_fallthru
      _
    %v55 = vld [vmem:[%s0] sm:$0xff]
    %v56 = vld [vmem:[%s0 + $0x8] sm:$0xff]
    %v57 = vld [vmem:[%s0 + $0x10] sm:$0xff]
    %v58 = vld [vmem:[%s0 + $0x18] sm:$0xff]
    %v59 = vld [vmem:[%s0 + $0x20] sm:$0xff]
    %v60 = vld [vmem:[%s0 + $0x28] sm:$0xff]
    %v61 = vld [vmem:[%s0 + $0x30] sm:$0xff]
    %v62 = vld [vmem:[%s0 + $0x38] sm:$0xff]
    %v63 = vld [vmem:[%s1] sm:$0xff]
    %v64 = vld [vmem:[%s1 + $0x8] sm:$0xff]
    %v65 = vld [vmem:[%s2] sm:$0x1]
    %v67 = vlaneseq
    %v68 = vshrl.u32 %v67, 7
    %v69 = vsub.s32 0, %v68
    %v70 = vrot.slane %v65, %v69
    %vm72 = vcmask 130048
    %v74 = vsel %vm72, %v55, 0
    %v77 = vsel %vm72, %v56, 0
    %v80 = vsel %vm72, %v57, 0
    %v83 = vsel %vm72, %v58, 0
    %v86 = vsel %vm72, %v59, 0
    %v89 = vsel %vm72, %v60, 0
    %v92 = vsel %vm72, %v61, 0
    %v95 = vsel %vm72, %v62, 0
    %97 = vmatprep.subr.mxu0 0.0
    %98 = vmatpush1.msra.mxu0 %v63
    %99 = vmatprep.subr.mxu0 0.0
    %100 = vmatpush1.msra.mxu0 %v64
    %101 = vmatprep.subr.mxu0 0.0
    %102 = vmatpush1.msra.mxu0 0.0
    %103 = vmatprep.subr.mxu0 0.0
    %104 = vmatpush1.msra.mxu0 0.0
    %105 = vmatprep.subr.mxu0 0.0
    %106 = vmatpush1.msra.mxu0 0.0
    %107 = vmatprep.subr.mxu0 0.0
    %108 = vmatpush1.msra.mxu0 0.0
    %109 = vmatprep.subr.mxu0 0.0
    %110 = vmatpush1.msra.mxu0 0.0
    %111 = vmatprep.subr.mxu0 0.0
    %112 = vmatpush1.msra.mxu0 0.0
    %113 = vmatprep.subr.mxu0 0.0
    %114 = vmatpush1.msra.mxu0 0.0
    %115 = vmatprep.subr.mxu0 0.0
    %116 = vmatpush1.msra.mxu0 0.0
    %117 = vmatprep.subr.mxu0 0.0
    %118 = vmatpush1.msra.mxu0 0.0
    %119 = vmatprep.subr.mxu0 0.0
    %120 = vmatpush1.msra.mxu0 0.0
    %121 = vmatprep.subr.mxu0 0.0
    %122 = vmatpush1.msra.mxu0 0.0
    %123 = vmatprep.subr.mxu0 0.0
    %124 = vmatpush1.msra.mxu0 0.0
    %125 = vmatprep.subr.mxu0 0.0
    %126 = vmatpush1.msra.mxu0 0.0
    %127 = vmatprep.subr.mxu0 0.0
    %128 = vmatpush1.msra.mxu0 0.0
    %129 = vmatprep.subr.mxu0 0.0
    %130 = vmatpush1.msra.mxu0 0.0
    %131 = vmatprep.subr.mxu0 0.0
    %132 = vmatpush1.msra.mxu0 0.0
    %133 = vmatprep.subr.mxu0 0.0
    %134 = vmatpush1.msra.mxu0 0.0
    %135 = vmatprep.subr.mxu0 0.0
    %136 = vmatpush1.msra.mxu0 0.0
    %137 = vmatprep.subr.mxu0 0.0
    %138 = vmatpush1.msra.mxu0 0.0
    %139 = vmatprep.subr.mxu0 0.0
    %140 = vmatpush1.msra.mxu0 0.0
    %141 = vmatprep.subr.mxu0 0.0
    %142 = vmatpush1.msra.mxu0 0.0
    %143 = vmatprep.subr.mxu0 0.0
    %144 = vmatpush1.msra.mxu0 0.0
    %145 = vmatprep.subr.mxu0 0.0
    %146 = vmatpush1.msra.mxu0 0.0
    %147 = vmatprep.subr.mxu0 0.0
    %148 = vmatpush1.msra.mxu0 0.0
    %149 = vmatprep.subr.mxu0 0.0
    %150 = vmatpush1.msra.mxu0 0.0
    %151 = vmatprep.subr.mxu0 0.0
    %152 = vmatpush1.msra.mxu0 0.0
    %153 = vmatprep.subr.mxu0 0.0
    %154 = vmatpush1.msra.mxu0 0.0
    %155 = vmatprep.subr.mxu0 0.0
    %156 = vmatpush1.msra.mxu0 0.0
    %157 = vmatprep.subr.mxu0 0.0
    %158 = vmatpush1.msra.mxu0 0.0
    %159 = vmatprep.subr.mxu0 0.0
    %160 = vmatpush1.msra.mxu0 0.0
    %161 = vmatprep.mubr.f32.mxu0 0.0
    %162 = vmatmul.mubr.f32.gmra.mrb[0].mxu0 %v74
    %v163 = vpop.f32.mrb[0].mxu0
    %v164 = vadd.f32 %v70, %v163
    %v165 = vpop.f32.mrb[0].mxu0
    %166 = vmatprep.mubr.f32.mxu0 0.0
    %167 = vmatmul.mubr.f32.gmra.mrb[0].mxu0 %v77
    %v168 = vpop.f32.mrb[0].mxu0
    %v169 = vadd.f32 %v70, %v168
    %v170 = vpop.f32.mrb[0].mxu0
    %171 = vmatprep.mubr.f32.mxu0 0.0
    %172 = vmatmul.mubr.f32.gmra.mrb[0].mxu0 %v80
    %v173 = vpop.f32.mrb[0].mxu0
    %v174 = vadd.f32 %v70, %v173
    %v175 = vpop.f32.mrb[0].mxu0
    %176 = vmatprep.mubr.f32.mxu0 0.0
    %177 = vmatmul.mubr.f32.gmra.mrb[0].mxu0 %v83
    %v178 = vpop.f32.mrb[0].mxu0
    %v179 = vadd.f32 %v70, %v178
    %v180 = vpop.f32.mrb[0].mxu0
    %181 = vmatprep.mubr.f32.mxu0 0.0
    %182 = vmatmul.mubr.f32.gmra.mrb[0].mxu0 %v86
    %v183 = vpop.f32.mrb[0].mxu0
    %v184 = vadd.f32 %v70, %v183
    %v185 = vpop.f32.mrb[0].mxu0
    %186 = vmatprep.mubr.f32.mxu0 0.0
    %187 = vmatmul.mubr.f32.gmra.mrb[0].mxu0 %v89
    %v188 = vpop.f32.mrb[0].mxu0
    %v189 = vadd.f32 %v70, %v188
    %v190 = vpop.f32.mrb[0].mxu0
    %191 = vmatprep.mubr.f32.mxu0 0.0
    %192 = vmatmul.mubr.f32.gmra.mrb[0].mxu0 %v92
    %v193 = vpop.f32.mrb[0].mxu0
    %v194 = vadd.f32 %v70, %v193
    %v195 = vpop.f32.mrb[0].mxu0
    %196 = vmatprep.mubr.f32.mxu0 0.0
    %197 = vmatmul.mubr.f32.gmra.mrb[0].mxu0 %v95
    %v198 = vpop.f32.mrb[0].mxu0
    %v199 = vadd.f32 %v70, %v198
    %v200 = vpop.f32.mrb[0].mxu0
    %201 = vdwg.mxu0
    %v202 = vmax.f32 %v164, 0.0
    %v203 = vmax.f32 %v169, 0.0
    %v204 = vmax.f32 %v174, 0.0
    %v205 = vmax.f32 %v179, 0.0
    %v206 = vmax.f32 %v184, 0.0
    %v207 = vmax.f32 %v189, 0.0
    %v208 = vmax.f32 %v194, 0.0
    %v209 = vmax.f32 %v199, 0.0
    %v210 = vld [vmem:[#allocation2] sm:$0xff]
    %v211 = vld [vmem:[#allocation2 + $0x8] sm:$0xff]
    %v212 = vld [vmem:[#allocation2 + $0x10] sm:$0xff]
    %v213 = vld [vmem:[#allocation2 + $0x18] sm:$0xff]
    %v214 = vld [vmem:[#allocation2 + $0x20] sm:$0xff]
    %v215 = vld [vmem:[#allocation2 + $0x28] sm:$0xff]
    %v216 = vld [vmem:[#allocation2 + $0x30] sm:$0xff]
    %v217 = vld [vmem:[#allocation2 + $0x38] sm:$0xff]
    %v218 = vld [vmem:[#allocation2 + $0x40] sm:$0xff]
    %v219 = vld [vmem:[#allocation2 + $0x48] sm:$0xff]
    %v220 = vld [vmem:[#allocation2 + $0x50] sm:$0xff]
    %v221 = vld [vmem:[#allocation2 + $0x58] sm:$0xff]
    %v222 = vld [vmem:[#allocation2 + $0x60] sm:$0xff]
    %v223 = vld [vmem:[#allocation2 + $0x68] sm:$0xff]
    %v224 = vld [vmem:[#allocation2 + $0x70] sm:$0xff]
    %v225 = vld [vmem:[#allocation2 + $0x78] sm:$0xff]
    %v226 = vld [vmem:[%s4] sm:$0x1]
    %v228 = vlaneseq
    %v229 = vshrl.u32 %v228, 7
    %v230 = vsub.s32 0, %v229
    %v231 = vrot.slane %v226, %v230
    %233 = vmatprep.subr.mxu0 0.0
    %234 = vmatpush1.msra.mxu0 %v210
    %235 = vmatprep.subr.mxu0 0.0
    %236 = vmatpush1.msra.mxu0 %v211
    %237 = vmatprep.subr.mxu0 0.0
    %238 = vmatpush1.msra.mxu0 %v212
    %239 = vmatprep.subr.mxu0 0.0
    %240 = vmatpush1.msra.mxu0 %v213
    %241 = vmatprep.subr.mxu0 0.0
    %242 = vmatpush1.msra.mxu0 %v214
    %243 = vmatprep.subr.mxu0 0.0
    %244 = vmatpush1.msra.mxu0 %v215
    %245 = vmatprep.subr.mxu0 0.0
    %246 = vmatpush1.msra.mxu0 %v216
    %247 = vmatprep.subr.mxu0 0.0
    %248 = vmatpush1.msra.mxu0 %v217
    %249 = vmatprep.subr.mxu0 0.0
    %250 = vmatpush1.msra.mxu0 %v218
    %251 = vmatprep.subr.mxu0 0.0
    %252 = vmatpush1.msra.mxu0 %v219
    %253 = vmatprep.subr.mxu0 0.0
    %254 = vmatpush1.msra.mxu0 %v220
    %255 = vmatprep.subr.mxu0 0.0
    %256 = vmatpush1.msra.mxu0 %v221
    %257 = vmatprep.subr.mxu0 0.0
    %258 = vmatpush1.msra.mxu0 %v222
    %259 = vmatprep.subr.mxu0 0.0
    %260 = vmatpush1.msra.mxu0 %v223
    %261 = vmatprep.subr.mxu0 0.0
    %262 = vmatpush1.msra.mxu0 %v224
    %263 = vmatprep.subr.mxu0 0.0
    %264 = vmatpush1.msra.mxu0 %v225
    %265 = vmatprep.subr.mxu0 0.0
    %266 = vmatpush1.msra.mxu0 0.0
    %267 = vmatprep.subr.mxu0 0.0
    %268 = vmatpush1.msra.mxu0 0.0
    %269 = vmatprep.subr.mxu0 0.0
    %270 = vmatpush1.msra.mxu0 0.0
    %271 = vmatprep.subr.mxu0 0.0
    %272 = vmatpush1.msra.mxu0 0.0
    %273 = vmatprep.subr.mxu0 0.0
    %274 = vmatpush1.msra.mxu0 0.0
    %275 = vmatprep.subr.mxu0 0.0
    %276 = vmatpush1.msra.mxu0 0.0
    %277 = vmatprep.subr.mxu0 0.0
    %278 = vmatpush1.msra.mxu0 0.0
    %279 = vmatprep.subr.mxu0 0.0
    %280 = vmatpush1.msra.mxu0 0.0
    %281 = vmatprep.subr.mxu0 0.0
    %282 = vmatpush1.msra.mxu0 0.0
    %283 = vmatprep.subr.mxu0 0.0
    %284 = vmatpush1.msra.mxu0 0.0
    %285 = vmatprep.subr.mxu0 0.0
    %286 = vmatpush1.msra.mxu0 0.0
    %287 = vmatprep.subr.mxu0 0.0
    %288 = vmatpush1.msra.mxu0 0.0
    %289 = vmatprep.subr.mxu0 0.0
    %290 = vmatpush1.msra.mxu0 0.0
    %291 = vmatprep.subr.mxu0 0.0
    %292 = vmatpush1.msra.mxu0 0.0
    %293 = vmatprep.subr.mxu0 0.0
    %294 = vmatpush1.msra.mxu0 0.0
    %295 = vmatprep.subr.mxu0 0.0
    %296 = vmatpush1.msra.mxu0 0.0
    %297 = vmatprep.mubr.f32.mxu0 0.0
    %298 = vmatmul.mubr.f32.gmra.mrb[0].mxu0 %v202
    %v299 = vpop.f32.mrb[0].mxu0
    %v300 = vadd.f32 %v231, %v299
    %v301 = vpop.f32.mrb[0].mxu0
    %302 = vmatprep.mubr.f32.mxu0 0.0
    %303 = vmatmul.mubr.f32.gmra.mrb[0].mxu0 %v203
    %v304 = vpop.f32.mrb[0].mxu0
    %v305 = vadd.f32 %v231, %v304
    %v306 = vpop.f32.mrb[0].mxu0
    %307 = vmatprep.mubr.f32.mxu0 0.0
    %308 = vmatmul.mubr.f32.gmra.mrb[0].mxu0 %v204
    %v309 = vpop.f32.mrb[0].mxu0
    %v310 = vadd.f32 %v231, %v309
    %v311 = vpop.f32.mrb[0].mxu0
    %312 = vmatprep.mubr.f32.mxu0 0.0
    %313 = vmatmul.mubr.f32.gmra.mrb[0].mxu0 %v205
    %v314 = vpop.f32.mrb[0].mxu0
    %v315 = vadd.f32 %v231, %v314
    %v316 = vpop.f32.mrb[0].mxu0
    %317 = vmatprep.mubr.f32.mxu0 0.0
    %318 = vmatmul.mubr.f32.gmra.mrb[0].mxu0 %v206
    %v319 = vpop.f32.mrb[0].mxu0
    %v320 = vadd.f32 %v231, %v319
    %v321 = vpop.f32.mrb[0].mxu0
    %322 = vmatprep.mubr.f32.mxu0 0.0
    %323 = vmatmul.mubr.f32.gmra.mrb[0].mxu0 %v207
    %v324 = vpop.f32.mrb[0].mxu0
    %v325 = vadd.f32 %v231, %v324
    %v326 = vpop.f32.mrb[0].mxu0
    %327 = vmatprep.mubr.f32.mxu0 0.0
    %328 = vmatmul.mubr.f32.gmra.mrb[0].mxu0 %v208
    %v329 = vpop.f32.mrb[0].mxu0
    %v330 = vadd.f32 %v231, %v329
    %v331 = vpop.f32.mrb[0].mxu0
    %332 = vmatprep.mubr.f32.mxu0 0.0
    %333 = vmatmul.mubr.f32.gmra.mrb[0].mxu0 %v209
    %v334 = vpop.f32.mrb[0].mxu0
    %v335 = vadd.f32 %v231, %v334
    %v336 = vpop.f32.mrb[0].mxu0
    %337 = vdwg.mxu0
    %v338 = vmax.f32 %v300, 0.0
    %v339 = vmax.f32 %v305, 0.0
    %v340 = vmax.f32 %v310, 0.0
    %v341 = vmax.f32 %v315, 0.0
    %v342 = vmax.f32 %v320, 0.0
    %v343 = vmax.f32 %v325, 0.0
    %v344 = vmax.f32 %v330, 0.0
    %v345 = vmax.f32 %v335, 0.0
    %v346 = vld [vmem:[#allocation5] sm:$0xff]
    %v347 = vld [vmem:[#allocation5 + $0x8] sm:$0xff]
    %v348 = vld [vmem:[#allocation5 + $0x10] sm:$0xff]
    %v349 = vld [vmem:[#allocation5 + $0x18] sm:$0xff]
    %v350 = vld [vmem:[#allocation5 + $0x20] sm:$0xff]
    %v351 = vld [vmem:[#allocation5 + $0x28] sm:$0xff]
    %v352 = vld [vmem:[#allocation5 + $0x30] sm:$0xff]
    %v353 = vld [vmem:[#allocation5 + $0x38] sm:$0xff]
    %v354 = vld [vmem:[#allocation5 + $0x40] sm:$0xff]
    %v355 = vld [vmem:[#allocation5 + $0x48] sm:$0xff]
    %v356 = vld [vmem:[#allocation5 + $0x50] sm:$0xff]
    %v357 = vld [vmem:[#allocation5 + $0x58] sm:$0xff]
    %v358 = vld [vmem:[#allocation5 + $0x60] sm:$0xff]
    %v359 = vld [vmem:[#allocation5 + $0x68] sm:$0xff]
    %v360 = vld [vmem:[#allocation5 + $0x70] sm:$0xff]
    %v361 = vld [vmem:[#allocation5 + $0x78] sm:$0xff]
    %v362 = vld [vmem:[%s6] sm:$0x1]
    %v364 = vlaneseq
    %v365 = vshrl.u32 %v364, 7
    %v366 = vsub.s32 0, %v365
    %v367 = vrot.slane %v362, %v366
    %369 = vmatprep.subr.mxu0 0.0
    %370 = vmatpush1.msra.mxu0 %v346
    %371 = vmatprep.subr.mxu0 0.0
    %372 = vmatpush1.msra.mxu0 %v347
    %373 = vmatprep.subr.mxu0 0.0
    %374 = vmatpush1.msra.mxu0 %v348
    %375 = vmatprep.subr.mxu0 0.0
    %376 = vmatpush1.msra.mxu0 %v349
    %377 = vmatprep.subr.mxu0 0.0
    %378 = vmatpush1.msra.mxu0 %v350
    %379 = vmatprep.subr.mxu0 0.0
    %380 = vmatpush1.msra.mxu0 %v351
    %381 = vmatprep.subr.mxu0 0.0
    %382 = vmatpush1.msra.mxu0 %v352
    %383 = vmatprep.subr.mxu0 0.0
    %384 = vmatpush1.msra.mxu0 %v353
    %385 = vmatprep.subr.mxu0 0.0
    %386 = vmatpush1.msra.mxu0 %v354
    %387 = vmatprep.subr.mxu0 0.0
    %388 = vmatpush1.msra.mxu0 %v355
    %389 = vmatprep.subr.mxu0 0.0
    %390 = vmatpush1.msra.mxu0 %v356
    %391 = vmatprep.subr.mxu0 0.0
    %392 = vmatpush1.msra.mxu0 %v357
    %393 = vmatprep.subr.mxu0 0.0
    %394 = vmatpush1.msra.mxu0 %v358
    %395 = vmatprep.subr.mxu0 0.0
    %396 = vmatpush1.msra.mxu0 %v359
    %397 = vmatprep.subr.mxu0 0.0
    %398 = vmatpush1.msra.mxu0 %v360
    %399 = vmatprep.subr.mxu0 0.0
    %400 = vmatpush1.msra.mxu0 %v361
    %401 = vmatprep.subr.mxu0 0.0
    %402 = vmatpush1.msra.mxu0 0.0
    %403 = vmatprep.subr.mxu0 0.0
    %404 = vmatpush1.msra.mxu0 0.0
    %405 = vmatprep.subr.mxu0 0.0
    %406 = vmatpush1.msra.mxu0 0.0
    %407 = vmatprep.subr.mxu0 0.0
    %408 = vmatpush1.msra.mxu0 0.0
    %409 = vmatprep.subr.mxu0 0.0
    %410 = vmatpush1.msra.mxu0 0.0
    %411 = vmatprep.subr.mxu0 0.0
    %412 = vmatpush1.msra.mxu0 0.0
    %413 = vmatprep.subr.mxu0 0.0
    %414 = vmatpush1.msra.mxu0 0.0
    %415 = vmatprep.subr.mxu0 0.0
    %416 = vmatpush1.msra.mxu0 0.0
    %417 = vmatprep.subr.mxu0 0.0
    %418 = vmatpush1.msra.mxu0 0.0
    %419 = vmatprep.subr.mxu0 0.0
    %420 = vmatpush1.msra.mxu0 0.0
    %421 = vmatprep.subr.mxu0 0.0
    %422 = vmatpush1.msra.mxu0 0.0
    %423 = vmatprep.subr.mxu0 0.0
    %424 = vmatpush1.msra.mxu0 0.0
    %425 = vmatprep.subr.mxu0 0.0
    %426 = vmatpush1.msra.mxu0 0.0
    %427 = vmatprep.subr.mxu0 0.0
    %428 = vmatpush1.msra.mxu0 0.0
    %429 = vmatprep.subr.mxu0 0.0
    %430 = vmatpush1.msra.mxu0 0.0
    %431 = vmatprep.subr.mxu0 0.0
    %432 = vmatpush1.msra.mxu0 0.0
    %433 = vmatprep.mubr.f32.mxu0 0.0
    %434 = vmatmul.mubr.f32.gmra.mrb[0].mxu0 %v338
    %v435 = vpop.f32.mrb[0].mxu0
    %v436 = vadd.f32 %v367, %v435
    %v437 = vpop.f32.mrb[0].mxu0
    %438 = vmatprep.mubr.f32.mxu0 0.0
    %439 = vmatmul.mubr.f32.gmra.mrb[0].mxu0 %v339
    %v440 = vpop.f32.mrb[0].mxu0
    %v441 = vadd.f32 %v367, %v440
    %v442 = vpop.f32.mrb[0].mxu0
    %443 = vmatprep.mubr.f32.mxu0 0.0
    %444 = vmatmul.mubr.f32.gmra.mrb[0].mxu0 %v340
    %v445 = vpop.f32.mrb[0].mxu0
    %v446 = vadd.f32 %v367, %v445
    %v447 = vpop.f32.mrb[0].mxu0
    %448 = vmatprep.mubr.f32.mxu0 0.0
    %449 = vmatmul.mubr.f32.gmra.mrb[0].mxu0 %v341
    %v450 = vpop.f32.mrb[0].mxu0
    %v451 = vadd.f32 %v367, %v450
    %v452 = vpop.f32.mrb[0].mxu0
    %453 = vmatprep.mubr.f32.mxu0 0.0
    %454 = vmatmul.mubr.f32.gmra.mrb[0].mxu0 %v342
    %v455 = vpop.f32.mrb[0].mxu0
    %v456 = vadd.f32 %v367, %v455
    %v457 = vpop.f32.mrb[0].mxu0
    %458 = vmatprep.mubr.f32.mxu0 0.0
    %459 = vmatmul.mubr.f32.gmra.mrb[0].mxu0 %v343
    %v460 = vpop.f32.mrb[0].mxu0
    %v461 = vadd.f32 %v367, %v460
    %v462 = vpop.f32.mrb[0].mxu0
    %463 = vmatprep.mubr.f32.mxu0 0.0
    %464 = vmatmul.mubr.f32.gmra.mrb[0].mxu0 %v344
    %v465 = vpop.f32.mrb[0].mxu0
    %v466 = vadd.f32 %v367, %v465
    %v467 = vpop.f32.mrb[0].mxu0
    %468 = vmatprep.mubr.f32.mxu0 0.0
    %469 = vmatmul.mubr.f32.gmra.mrb[0].mxu0 %v345
    %v470 = vpop.f32.mrb[0].mxu0
    %v471 = vadd.f32 %v367, %v470
    %v472 = vpop.f32.mrb[0].mxu0
    %473 = vdwg.mxu0
    %474 = vst [vmem:[#allocation7] sm:$0xff] %v436
    %475 = vst [vmem:[#allocation7 + $0x8] sm:$0xff] %v441
    %476 = vst [vmem:[#allocation7 + $0x10] sm:$0xff] %v446
    %477 = vst [vmem:[#allocation7 + $0x18] sm:$0xff] %v451
    %478 = vst [vmem:[#allocation7 + $0x20] sm:$0xff] %v456
    %479 = vst [vmem:[#allocation7 + $0x28] sm:$0xff] %v461
    %480 = vst [vmem:[#allocation7 + $0x30] sm:$0xff] %v466
    %481 = vst [vmem:[#allocation7 + $0x38] sm:$0xff] %v471
    // Predicated region
    $region38: #{tpu_custom_call.1} parent=1 // pred_check
      _
    $region39: #{tpu_custom_call.1} parent=1 // pred_check_branch
      %483 = sbr.rel (0) target = $region41
    $region40: #{tpu_custom_call.1} parent=1 // pred_region
      %s485 = ssub.s32 1024, 1024
      %486 = vsyncadd [#allocation4], %s485
      %s487 = sshll.u32 [#allocation7], 4
      %s488 = int_to_ptr.vmem [resolvable:$true] %s487
      %493 = dma.vmem_to_hbm [thread:$0]  %s488, 1024, %s7, [#allocation4], 128, 128, 8
    $region41: #{tpu_custom_call.1} parent=1 // pred_fallthru
      _
    // Predicated region
    $region42: #{tpu_custom_call.1} parent=1 // pred_check
      _
    $region43: #{tpu_custom_call.1} parent=1 // pred_check_branch
      %495 = sbr.rel (0) target = $region45
    $region44: #{tpu_custom_call.1} parent=1 // pred_region
      %496 = dma.done [#allocation4], 1024
    $region45: #{tpu_custom_call.1} parent=1 // pred_fallthru
      _
    %497 = vsyncpa [#allocation3], 1
    %498 = vsyncpa [#allocation6], 1
    %499 = vsyncpa [#allocation4], 1

</llo_original>
